<compile_context>
chip_gen: v7x
topology: tpu7x:2x2x1
jax: 0.10.0
libtpu: 0.0.40
codegen_flags: <defaults>
</compile_context>

<pallas_src>
import functools

import jax
import jax.numpy as jnp
from jax.experimental import pallas as pl
from jax.experimental.pallas import tpu as pltpu


def top_down_attention_kernel(img_ref, xcat_ref, hc_ref, wcat_ref,
                              joint_ref, hc_out_ref,
                              *, H, r_blstm, r_faimg, r_fahid, r_bfa):
    B, N, D = img_ref.shape
    A = joint_ref.shape[-1]
    G = 4 * H

    img = img_ref[...].astype(jnp.float32)                    # (B, N, D)
    h1 = hc_ref[:, 0:H].astype(jnp.float32)                   # (B, H)
    c1 = hc_ref[:, H:2 * H].astype(jnp.float32)               # (B, H)

    # ---- fused LSTMCell gates: activation assembled in registers ------------
    # lanes: [h2 | emb | h1 | sum_n(img)] ; matching weight row order in wcat
    # (1/N is folded into the image rows of the gate weight wrapper-side).
    img_sum = jnp.sum(img, axis=1)                             # (B, D)
    x = jnp.concatenate(
        [xcat_ref[...].astype(jnp.float32), h1, img_sum], axis=1)  # (B, K)
    K = x.shape[-1]

    gates = jnp.dot(x, wcat_ref[0:K, 0:G],
                    preferred_element_type=jnp.float32)        # (B, 4H)
    gates = gates + wcat_ref[r_blstm:r_blstm + 1, 0:G]         # b_ih + b_hh

    i_g = jax.nn.sigmoid(gates[:, 0 * H:1 * H])
    f_g = jax.nn.sigmoid(gates[:, 1 * H:2 * H])
    g_g = jnp.tanh(gates[:, 2 * H:3 * H])
    o_g = jax.nn.sigmoid(gates[:, 3 * H:4 * H])
    c_new = f_g * c1 + i_g * g_g
    h_new = o_g * jnp.tanh(c_new)
    hc_out_ref[...] = jnp.concatenate([h_new, c_new], axis=1).astype(hc_out_ref.dtype)

    # ---- joint = relu(fa_image(image_feat) + fa_hidden(h1_new)[:, None, :]) -
    img2d = img.reshape(B * N, D)                              # flat: one MXU call
    image_fa = jnp.dot(img2d, wcat_ref[r_faimg:r_faimg + D, 0:A],
                       preferred_element_type=jnp.float32)     # (B*N, A)
    hidden_fa = jnp.dot(h_new, wcat_ref[r_fahid:r_fahid + H, 0:A],
                        preferred_element_type=jnp.float32)    # (B, A)
    hidden_fa = hidden_fa + wcat_ref[r_bfa:r_bfa + 1, 0:A]     # pre-summed biases

    joint = jnp.maximum(image_fa.reshape(B, N, A) + hidden_fa[:, None, :], 0.0)
    # TODO(synk): training-mode dropout omitted (eval semantics: identity).
    joint_ref[...] = joint.astype(joint_ref.dtype)


def _round_up8(x):
    return ((x + 7) // 8) * 8


def prepare_weights(params, num_regions):
    """Pack all weights / biases into one 8-row-aligned VMEM slab.

    Normally computed once and reused across timesteps.
    Returns (wcat, meta) where meta holds static row offsets.
    """
    f32 = jnp.float32
    H = params['w_hh'].shape[0]
    E = params['w_ih_emb'].shape[0]
    D = params['w_ih_img'].shape[0]
    A = params['w_fa_image'].shape[1]
    H4 = 4 * H

    # Gate weight rows match the kernel's activation layout [h2 | emb | h1 | img_sum];
    # fold 1/N into the image rows so the kernel only needs a sum over regions.
    w_gate = jnp.concatenate(
        [params['w_ih_h2'], params['w_ih_emb'], params['w_hh'],
         params['w_ih_img'] / num_regions], axis=0).astype(f32)      # (K, 4H)
    K = w_gate.shape[0]

    WL = max(H4, A)                       # lane width of the merged slab
    r_blstm = _round_up8(K)
    r_faimg = _round_up8(r_blstm + 1)
    r_fahid = _round_up8(r_faimg + D)
    r_bfa = _round_up8(r_fahid + H)
    rows = _round_up8(r_bfa + 1)

    wcat = jnp.zeros((rows, WL), f32)
    wcat = wcat.at[0:K, 0:H4].set(w_gate)
    wcat = wcat.at[r_blstm:r_blstm + 1, 0:H4].set(params['b_lstm'].astype(f32))
    wcat = wcat.at[r_faimg:r_faimg + D, 0:A].set(params['w_fa_image'].astype(f32))
    wcat = wcat.at[r_fahid:r_fahid + H, 0:A].set(params['w_fa_hidden'].astype(f32))
    wcat = wcat.at[r_bfa:r_bfa + 1, 0:A].set(
        (params['b_fa_image'] + params['b_fa_hidden']).astype(f32))

    meta = dict(H=H, E=E, D=D, A=A,
                r_blstm=r_blstm, r_faimg=r_faimg, r_fahid=r_fahid, r_bfa=r_bfa)
    return wcat, meta


def top_down_attention_lstm(image_feat, embedding, h1, c1, h2, wcat, meta):
    """Returns (joint_feature (B, N, A), h1_new (B, H), c1_new (B, H))."""
    B, N, D = image_feat.shape
    H = meta['H']
    A = meta['A']
    f32 = jnp.float32

    # Pack the small per-step vectors into two arrays (fewer DMA descriptors).
    xcat = jnp.concatenate([h2, embedding], axis=1).astype(f32)    # (B, H+E)
    hc = jnp.concatenate([h1, c1], axis=1).astype(f32)             # (B, 2H)

    kernel = functools.partial(
        top_down_attention_kernel, H=H,
        r_blstm=meta['r_blstm'], r_faimg=meta['r_faimg'],
        r_fahid=meta['r_fahid'], r_bfa=meta['r_bfa'])

    def vmem_spec():
        return pl.BlockSpec(memory_space=pltpu.MemorySpace.VMEM)

    joint, hc_new = pl.pallas_call(
        kernel,
        in_specs=[vmem_spec(), vmem_spec(), vmem_spec(), vmem_spec()],
        out_specs=(vmem_spec(), vmem_spec()),
        out_shape=(
            jax.ShapeDtypeStruct((B, N, A), f32),
            jax.ShapeDtypeStruct((B, 2 * H), f32),
        ),
        # Recurrent state updated in place (hc input -> hc_new output).
        input_output_aliases={2: 1},
    )(image_feat.astype(f32), xcat, hc, wcat)

    return joint, hc_new[:, :H], hc_new[:, H:]


def ref_forward(image_feat, embedding, h1, c1, h2, params):
    """Pure-JAX reference mirroring the PyTorch forward."""
    img_mean = image_feat.mean(axis=1)
    w_ih = jnp.concatenate(
        [params['w_ih_h2'], params['w_ih_img'], params['w_ih_emb']], axis=0)
    x = jnp.concatenate([h2, img_mean, embedding], axis=1)
    gates = x @ w_ih + h1 @ params['w_hh'] + params['b_lstm']
    H = h1.shape[1]
    i = jax.nn.sigmoid(gates[:, :H])
    f = jax.nn.sigmoid(gates[:, H:2 * H])
    g = jnp.tanh(gates[:, 2 * H:3 * H])
    o = jax.nn.sigmoid(gates[:, 3 * H:])
    c_new = f * c1 + i * g
    h_new = o * jnp.tanh(c_new)
    image_fa = jnp.einsum('bnd,da->bna', image_feat,
                          params['w_fa_image']) + params['b_fa_image']
    hidden_fa = h_new @ params['w_fa_hidden'] + params['b_fa_hidden']
    joint = jax.nn.relu(image_fa + hidden_fa[:, None, :])
    return joint, h_new, c_new


if __name__ == "__main__":
    # Small shapes consistent with the module's forward.
    B, N = 2, 16           # batch, number of image regions
    D_IMG = 32             # image_feat_dim
    E = 16                 # embed_dim
    H = 32                 # hidden_dim
    A = 64                 # attention_dim (out_dim)

    key = jax.random.PRNGKey(0)
    ks = jax.random.split(key, 16)
    s = 0.1

    # Deterministic synthetic parameters (PyTorch Linear/LSTMCell shapes, pre-transposed).
    params = {
        # LSTMCell weight_ih: (4H, H + D + E) -> split row-wise & transposed to (in, 4H)
        'w_ih_h2':  (s * jax.random.normal(ks[0], (H, 4 * H))).astype(jnp.float32),
        'w_ih_img': (s * jax.random.normal(ks[1], (D_IMG, 4 * H))).astype(jnp.float32),
        'w_ih_emb': (s * jax.random.normal(ks[2], (E, 4 * H))).astype(jnp.float32),
        # LSTMCell weight_hh: (4H, H) -> (H, 4H)
        'w_hh':     (s * jax.random.normal(ks[3], (H, 4 * H))).astype(jnp.float32),
        # bias_ih + bias_hh combined, kept 2D for TPU friendliness
        'b_lstm':   (s * jax.random.normal(ks[4], (1, 4 * H))).astype(jnp.float32),
        # fa_image: Linear(D_IMG -> A)
        'w_fa_image': (s * jax.random.normal(ks[5], (D_IMG, A))).astype(jnp.float32),
        'b_fa_image': (s * jax.random.normal(ks[6], (1, A))).astype(jnp.float32),
        # fa_hidden: Linear(H -> A)
        'w_fa_hidden': (s * jax.random.normal(ks[7], (H, A))).astype(jnp.float32),
        'b_fa_hidden': (s * jax.random.normal(ks[8], (1, A))).astype(jnp.float32),
    }

    image_feat = jax.random.normal(ks[9], (B, N, D_IMG), dtype=jnp.float32)
    embedding = jax.random.normal(ks[10], (B, E), dtype=jnp.float32)
    # Registry LSTM state: td_hidden=(h1,c1), lm_hidden=(h2,c2); c2 unused in forward.
    h1 = jax.random.normal(ks[11], (B, H), dtype=jnp.float32)
    c1 = jax.random.normal(ks[12], (B, H), dtype=jnp.float32)
    h2 = jax.random.normal(ks[13], (B, H), dtype=jnp.float32)

    wcat, meta = prepare_weights(params, num_regions=N)   # one-time weight packing
    joint, h1_new, c1_new = top_down_attention_lstm(
        image_feat, embedding, h1, c1, h2, wcat, meta)
    jax.block_until_ready((joint, h1_new, c1_new))

    joint_r, h1_r, c1_r = ref_forward(image_feat, embedding, h1, c1, h2, params)
    assert joint.shape == (B, N, A)
    assert jnp.allclose(joint, joint_r, atol=1e-5, rtol=1e-5)
    assert jnp.allclose(h1_new, h1_r, atol=1e-5, rtol=1e-5)
    assert jnp.allclose(c1_new, c1_r, atol=1e-5, rtol=1e-5)

    print("KERNEL_OK")
</pallas_src>

<mosaic_0001>
module attributes {stable_mosaic.version = 11 : i64} {
  func.func @top_down_attention_kernel(%arg0: memref<2x16x32xf32, #tpu.memory_space<vmem>>, %arg1: memref<2x48xf32, #tpu.memory_space<vmem>>, %arg2: memref<2x64xf32, #tpu.memory_space<vmem>>, %arg3: memref<192x128xf32, #tpu.memory_space<vmem>>, %arg4: memref<2x16x64xf32, #tpu.memory_space<vmem>>, %arg5: memref<2x64xf32, #tpu.memory_space<vmem>>) attributes {dimension_semantics = [], scalar_prefetch = 0 : i64, scratch_operands = 0 : i64, tpu.core_type = #tpu.core_type<tc>} {
    %c0 = arith.constant 0 : index
    %c0_0 = arith.constant 0 : index
    %c0_1 = arith.constant 0 : index
    %0 = vector.load %arg0[%c0, %c0_0, %c0_1] : memref<2x16x32xf32, #tpu.memory_space<vmem>>, vector<2x16x32xf32>
    %c0_2 = arith.constant 0 : index
    %c0_3 = arith.constant 0 : index
    %1 = vector.load %arg2[%c0_2, %c0_3] : memref<2x64xf32, #tpu.memory_space<vmem>>, vector<2x32xf32>
    %c0_4 = arith.constant 0 : index
    %c32 = arith.constant 32 : index
    %2 = vector.load %arg2[%c0_4, %c32] : memref<2x64xf32, #tpu.memory_space<vmem>>, vector<2x32xf32>
    %cst = arith.constant dense<0.000000e+00> : vector<2x32xf32>
    %3 = vector.multi_reduction <add>, %0, %cst [1] : vector<2x16x32xf32> to vector<2x32xf32>
    %c0_5 = arith.constant 0 : index
    %c0_6 = arith.constant 0 : index
    %4 = vector.load %arg1[%c0_5, %c0_6] : memref<2x48xf32, #tpu.memory_space<vmem>>, vector<2x48xf32>
    %5 = tpu.concatenate %4, %1, %3 in 1 : vector<2x48xf32>, vector<2x32xf32>, vector<2x32xf32> -> vector<2x112xf32>
    %c0_7 = arith.constant 0 : index
    %c0_8 = arith.constant 0 : index
    %6 = vector.load %arg3[%c0_7, %c0_8] : memref<192x128xf32, #tpu.memory_space<vmem>>, vector<112x128xf32>
    %cst_9 = arith.constant dense<0.000000e+00> : vector<2x128xf32>
    %7 = tpu.matmul %5, %6, %cst_9 {dimension_numbers = #tpu.dot_dimension_numbers<[1], [0], [0], [1], [0, 0, 1, 1], [], []>} : vector<2x112xf32>, vector<112x128xf32>, vector<2x128xf32> -> vector<2x128xf32>
    %c112 = arith.constant 112 : index
    %c0_10 = arith.constant 0 : index
    %8 = vector.load %arg3[%c112, %c0_10] : memref<192x128xf32, #tpu.memory_space<vmem>>, vector<1x128xf32>
    %9 = vector.broadcast %8 : vector<1x128xf32> to vector<2x128xf32>
    %10 = arith.addf %7, %9 : vector<2x128xf32>
    %11 = vector.extract_strided_slice %10 {offsets = [0, 0], sizes = [2, 32], strides = [1, 1]} : vector<2x128xf32> to vector<2x32xf32>
    %12 = arith.negf %11 : vector<2x32xf32>
    %13 = math.exp %12 : vector<2x32xf32>
    %cst_11 = arith.constant 1.000000e+00 : f32
    %14 = vector.broadcast %cst_11 : f32 to vector<2x32xf32>
    %15 = arith.addf %14, %13 : vector<2x32xf32>
    %16 = arith.divf %14, %15 : vector<2x32xf32>
    %17 = vector.extract_strided_slice %10 {offsets = [0, 32], sizes = [2, 32], strides = [1, 1]} : vector<2x128xf32> to vector<2x32xf32>
    %18 = arith.negf %17 : vector<2x32xf32>
    %19 = math.exp %18 : vector<2x32xf32>
    %cst_12 = arith.constant 1.000000e+00 : f32
    %20 = vector.broadcast %cst_12 : f32 to vector<2x32xf32>
    %21 = arith.addf %20, %19 : vector<2x32xf32>
    %22 = arith.divf %20, %21 : vector<2x32xf32>
    %23 = vector.extract_strided_slice %10 {offsets = [0, 64], sizes = [2, 32], strides = [1, 1]} : vector<2x128xf32> to vector<2x32xf32>
    %24 = math.tanh %23 : vector<2x32xf32>
    %25 = vector.extract_strided_slice %10 {offsets = [0, 96], sizes = [2, 32], strides = [1, 1]} : vector<2x128xf32> to vector<2x32xf32>
    %26 = arith.negf %25 : vector<2x32xf32>
    %27 = math.exp %26 : vector<2x32xf32>
    %cst_13 = arith.constant 1.000000e+00 : f32
    %28 = vector.broadcast %cst_13 : f32 to vector<2x32xf32>
    %29 = arith.addf %28, %27 : vector<2x32xf32>
    %30 = arith.divf %28, %29 : vector<2x32xf32>
    %31 = arith.mulf %22, %2 : vector<2x32xf32>
    %32 = arith.mulf %16, %24 : vector<2x32xf32>
    %33 = arith.addf %31, %32 : vector<2x32xf32>
    %34 = math.tanh %33 : vector<2x32xf32>
    %35 = arith.mulf %30, %34 : vector<2x32xf32>
    %36 = tpu.concatenate %35, %33 in 1 : vector<2x32xf32>, vector<2x32xf32> -> vector<2x64xf32>
    %c0_14 = arith.constant 0 : index
    %c0_15 = arith.constant 0 : index
    %37 = vector.load %arg5[%c0_14, %c0_15] : memref<2x64xf32, #tpu.memory_space<vmem>>, vector<2x64xf32>
    tpu.vector_store %arg5[%c0_14, %c0_15], %36 {strides = array<i32>} : memref<2x64xf32, #tpu.memory_space<vmem>>, vector<2x64xf32>,
    %38 = vector.shape_cast %0 : vector<2x16x32xf32> to vector<32x32xf32>
    %c120 = arith.constant 120 : index
    %c0_16 = arith.constant 0 : index
    %39 = vector.load %arg3[%c120, %c0_16] : memref<192x128xf32, #tpu.memory_space<vmem>>, vector<32x64xf32>
    %cst_17 = arith.constant dense<0.000000e+00> : vector<32x64xf32>
    %40 = tpu.matmul %38, %39, %cst_17 {dimension_numbers = #tpu.dot_dimension_numbers<[1], [0], [0], [1], [0, 0, 1, 1], [], []>} : vector<32x32xf32>, vector<32x64xf32>, vector<32x64xf32> -> vector<32x64xf32>
    %c152 = arith.constant 152 : index
    %c0_18 = arith.constant 0 : index
    %41 = vector.load %arg3[%c152, %c0_18] : memref<192x128xf32, #tpu.memory_space<vmem>>, vector<32x64xf32>
    %cst_19 = arith.constant dense<0.000000e+00> : vector<2x64xf32>
    %42 = tpu.matmul %35, %41, %cst_19 {dimension_numbers = #tpu.dot_dimension_numbers<[1], [0], [0], [1], [0, 0, 1, 1], [], []>} : vector<2x32xf32>, vector<32x64xf32>, vector<2x64xf32> -> vector<2x64xf32>
    %c184 = arith.constant 184 : index
    %c0_20 = arith.constant 0 : index
    %43 = vector.load %arg3[%c184, %c0_20] : memref<192x128xf32, #tpu.memory_space<vmem>>, vector<1x64xf32>
    %44 = vector.broadcast %43 : vector<1x64xf32> to vector<2x64xf32>
    %45 = arith.addf %42, %44 : vector<2x64xf32>
    %46 = vector.shape_cast %40 : vector<32x64xf32> to vector<2x16x64xf32>
    %47 = vector.shape_cast %45 : vector<2x64xf32> to vector<2x1x64xf32>
    %48 = vector.broadcast %47 : vector<2x1x64xf32> to vector<2x16x64xf32>
    %49 = arith.addf %46, %48 : vector<2x16x64xf32>
    %cst_21 = arith.constant 0.000000e+00 : f32
    %50 = vector.broadcast %cst_21 : f32 to vector<2x16x64xf32>
    %51 = arith.maximumf %49, %50 : vector<2x16x64xf32>
    %c0_22 = arith.constant 0 : index
    %c0_23 = arith.constant 0 : index
    %c0_24 = arith.constant 0 : index
    %52 = vector.load %arg4[%c0_22, %c0_23, %c0_24] : memref<2x16x64xf32, #tpu.memory_space<vmem>>, vector<2x16x64xf32>
    tpu.vector_store %arg4[%c0_22, %c0_23, %c0_24], %51 {strides = array<i32>} : memref<2x16x64xf32, #tpu.memory_space<vmem>>, vector<2x16x64xf32>,
    return
  }
}

</mosaic_0001>

<llo_original>
// kernel: tpu_custom_call.1
$region0: #{tpu_custom_call.1}
  #allocation0 [shape = 'u32[]', space=smem, size = 0x4, offset = 0x4, fixed_abs, tag = 'smem constant byte address 0x4 - core index']
  #allocation1 [shape = 'u32[144,128]{1,0:T(1,128)}', space=vmem, size = 0x12000, scoped, tag = 'internal scratch']
  %s0 = inlined_call_operand.hbm [shape: f32[2,16,32], index: 0, kind: input, shape index: {}]
  %s1 = inlined_call_operand.vmem [shape: f32[2,48], index: 1, kind: input, shape index: {}]
  %s2 = inlined_call_operand.hbm [shape: f32[2,64], index: 2, kind: input, shape index: {}, may-alias: {2,5}]
  %s3 = inlined_call_operand.hbm [shape: f32[192,128], index: 3, kind: input, shape index: {}]
  %s4 = inlined_call_operand.hbm [shape: f32[2,16,64], index: 4, kind: output, shape index: {0}]
  %s5 = inlined_call_operand.hbm [shape: f32[2,64], index: 5, kind: output, shape index: {1}, may-alias: {2,5}]
  %6 = xla_tuple %s4, %s5
  %s7 = sld [smem:[#allocation0]]
  $region46: #{tpu_custom_call.1} parent=0
    _
  %s9 = ssub.s32 1, %s7
  %s10 = scalar_select 0, %s9, %s7
  $region1: #{tpu_custom_call.1} parent=0
    #allocation2 [shape = 'u8[16384]{0}', space=vmem, size = 0x4000, scoped, tag = 'input window, operand 0, single buffered']
    #allocation3 [shape = 's32[1]{0}', space=sflag, size = 0x4, scoped, tag = 'scoped memory for tpu_custom_call.1']
    #allocation4 [shape = 's32[1]{0}', space=sflag, size = 0x4, scoped, tag = 'scoped memory for tpu_custom_call.1']
    #allocation5 [shape = 'u8[1024]{0}', space=vmem, size = 0x400, scoped, tag = 'input window, operand 2, single buffered']
    #allocation6 [shape = 's32[1]{0}', space=sflag, size = 0x4, scoped, tag = 'scoped memory for tpu_custom_call.1']
    #allocation7 [shape = 'u8[98304]{0}', space=vmem, size = 0x18000, scoped, tag = 'input window, operand 3, single buffered']
    #allocation8 [shape = 'u8[16384]{0}', space=vmem, size = 0x4000, scoped, tag = 'output window, operand 0, single buffered']
    #allocation9 [shape = 'u8[1024]{0}', space=vmem, size = 0x400, scoped, tag = 'output window, operand 1, single buffered']
    #allocation10 [shape = 's32[1]{0}', space=sflag, size = 0x4, scoped, tag = 'scoped memory for tpu_custom_call.1']
    %11 = vsyncpa [#allocation3], 0
    %12 = vsyncpa [#allocation6], 0
    %13 = vsyncpa [#allocation4], 0
    %14 = vsyncpa [#allocation10], 0
    // Predicated region
    $region2: #{tpu_custom_call.1} parent=1 // pred_check
      _
    $region3: #{tpu_custom_call.1} parent=1 // pred_check_branch
      %16 = sbr.rel (0) target = $region5
    $region4: #{tpu_custom_call.1} parent=1 // pred_region
      %s18 = ssub.s32 512, 512
      %19 = vsyncadd [#allocation3], %s18
      %s20 = sshll.u32 [#allocation2], 4
      %s21 = int_to_ptr.vmem [resolvable:$true] %s20
      %26 = dma.hbm_to_vmem [thread:$0]  %s0, 512, %s21, [#allocation3], 128, 128, 8
    $region5: #{tpu_custom_call.1} parent=1 // pred_fallthru
      _
    // Predicated region
    $region6: #{tpu_custom_call.1} parent=1 // pred_check
      _
    $region7: #{tpu_custom_call.1} parent=1 // pred_check_branch
      %28 = sbr.rel (0) target = $region9
    $region8: #{tpu_custom_call.1} parent=1 // pred_region
      _
    $region9: #{tpu_custom_call.1} parent=1 // pred_fallthru
      _
    // Predicated region
    $region10: #{tpu_custom_call.1} parent=1 // pred_check
      _
    $region11: #{tpu_custom_call.1} parent=1 // pred_check_branch
      %30 = sbr.rel (0) target = $region13
    $region12: #{tpu_custom_call.1} parent=1 // pred_region
      %s32 = ssub.s32 32, 32
      %33 = vsyncadd [#allocation6], %s32
      %s35 = sshll.u32 [#allocation5], 4
      %s36 = int_to_ptr.vmem [resolvable:$true] %s35
      %38 = dma.hbm_to_vmem [thread:$0]  %s2, 32, %s36, [#allocation6]
    $region13: #{tpu_custom_call.1} parent=1 // pred_fallthru
      _
    // Predicated region
    $region14: #{tpu_custom_call.1} parent=1 // pred_check
      _
    $region15: #{tpu_custom_call.1} parent=1 // pred_check_branch
      %40 = sbr.rel (0) target = $region17
    $region16: #{tpu_custom_call.1} parent=1 // pred_region
      %s42 = ssub.s32 3072, 3072
      %43 = vsyncadd [#allocation6], %s42
      %s44 = sshll.u32 [#allocation7], 4
      %s45 = int_to_ptr.vmem [resolvable:$true] %s44
      %50 = dma.hbm_to_vmem [thread:$0]  %s3, 3072, %s45, [#allocation6], 128, 128, 8
    $region17: #{tpu_custom_call.1} parent=1 // pred_fallthru
      _
    // Predicated region
    $region18: #{tpu_custom_call.1} parent=1 // pred_check
      _
    $region19: #{tpu_custom_call.1} parent=1 // pred_check_branch
      %52 = sbr.rel (0) target = $region21
    $region20: #{tpu_custom_call.1} parent=1 // pred_region
      %53 = dma.done [#allocation3], 512
    $region21: #{tpu_custom_call.1} parent=1 // pred_fallthru
      _
    // Predicated region
    $region22: #{tpu_custom_call.1} parent=1 // pred_check
      _
    $region23: #{tpu_custom_call.1} parent=1 // pred_check_branch
      %55 = sbr.rel (0) target = $region25
    $region24: #{tpu_custom_call.1} parent=1 // pred_region
      %56 = dma.done [#allocation6], 32
    $region25: #{tpu_custom_call.1} parent=1 // pred_fallthru
      _
    // Predicated region
    $region26: #{tpu_custom_call.1} parent=1 // pred_check
      _
    $region27: #{tpu_custom_call.1} parent=1 // pred_check_branch
      %58 = sbr.rel (0) target = $region29
    $region28: #{tpu_custom_call.1} parent=1 // pred_region
      %59 = dma.done [#allocation6], 3072
    $region29: #{tpu_custom_call.1} parent=1 // pred_fallthru
      _
    %v60 = vld [vmem:[#allocation2] sm:$0xff]
    %v61 = vld [vmem:[#allocation2 + $0x8] sm:$0xff]
    %v62 = vld [vmem:[#allocation2 + $0x10] sm:$0xff]
    %v63 = vld [vmem:[#allocation2 + $0x18] sm:$0xff]
    %v64 = vld [vmem:[#allocation5] sm:$0x3]
    %vm65 = vcmask 261120
    %v66 = vsel %vm65, %v60, 0.0
    %v67 = vsel %vm65, %v61, 0.0
    %v68 = vadd.f32 %v66, %v67
    %v69 = vrot.slane %v68, 4
    %v70 = vadd.f32 %v68, %v69
    %v71 = vrot.slane %v70, 2
    %v72 = vadd.f32 %v70, %v71
    %v73 = vrot.slane %v72, 1
    %v74 = vadd.f32 %v72, %v73
    %v75 = vsel %vm65, %v62, 0.0
    %v76 = vsel %vm65, %v63, 0.0
    %v77 = vadd.f32 %v75, %v76
    %v78 = vrot.slane %v77, 4
    %v79 = vadd.f32 %v77, %v78
    %v80 = vrot.slane %v79, 2
    %v81 = vadd.f32 %v79, %v80
    %v82 = vrot.slane %v81, 1
    %v83 = vadd.f32 %v81, %v82
    %v84 = vld [vmem:[%s1] sm:$0x3]
    %86 = vrot.lane.b32.xlu0 %v64, 48
    %v87 = vpop.permute.xlu0 %86
    %vm91 = vcmask 1041409
    %v92 = vsel %vm91, %v83, %v74
    %93 = vrot.lane.b32.xlu0 %v92, 80
    %v94 = vpop.permute.xlu0 %93
    %vm96 = vcmask 392192
    %v97 = vsel %vm96, %v84, %v87
    %vm98 = vcmask 654336
    %v99 = vsel %vm98, %v97, %v94
    %v100 = vld [vmem:[#allocation7] sm:$0xff]
    %v101 = vld [vmem:[#allocation7 + $0x8] sm:$0xff]
    %v102 = vld [vmem:[#allocation7 + $0x10] sm:$0xff]
    %v103 = vld [vmem:[#allocation7 + $0x18] sm:$0xff]
    %v104 = vld [vmem:[#allocation7 + $0x20] sm:$0xff]
    %v105 = vld [vmem:[#allocation7 + $0x28] sm:$0xff]
    %v106 = vld [vmem:[#allocation7 + $0x30] sm:$0xff]
    %v107 = vld [vmem:[#allocation7 + $0x38] sm:$0xff]
    %v108 = vld [vmem:[#allocation7 + $0x40] sm:$0xff]
    %v109 = vld [vmem:[#allocation7 + $0x48] sm:$0xff]
    %v110 = vld [vmem:[#allocation7 + $0x50] sm:$0xff]
    %v111 = vld [vmem:[#allocation7 + $0x58] sm:$0xff]
    %v112 = vld [vmem:[#allocation7 + $0x60] sm:$0xff]
    %v113 = vld [vmem:[#allocation7 + $0x68] sm:$0xff]
    %v114 = vld [vmem:[#allocation7 + $0x70] sm:$0x1]
    %v115 = vlaneseq
    %v116 = vshrl.u32 %v115, 7
    %v117 = vsub.s32 0, %v116
    %v118 = vrot.slane %v114, %v117
    %vm119 = vcmask 916480
    %v121 = vsel %vm119, %v99, 0
    %123 = vmatprep.subr.mxu0 0.0
    %124 = vmatpush1.msra.mxu0 %v100
    %125 = vmatprep.subr.mxu0 0.0
    %126 = vmatpush1.msra.mxu0 %v101
    %127 = vmatprep.subr.mxu0 0.0
    %128 = vmatpush1.msra.mxu0 %v102
    %129 = vmatprep.subr.mxu0 0.0
    %130 = vmatpush1.msra.mxu0 %v103
    %131 = vmatprep.subr.mxu0 0.0
    %132 = vmatpush1.msra.mxu0 %v104
    %133 = vmatprep.subr.mxu0 0.0
    %134 = vmatpush1.msra.mxu0 %v105
    %135 = vmatprep.subr.mxu0 0.0
    %136 = vmatpush1.msra.mxu0 %v106
    %137 = vmatprep.subr.mxu0 0.0
    %138 = vmatpush1.msra.mxu0 %v107
    %139 = vmatprep.subr.mxu0 0.0
    %140 = vmatpush1.msra.mxu0 %v108
    %141 = vmatprep.subr.mxu0 0.0
    %142 = vmatpush1.msra.mxu0 %v109
    %143 = vmatprep.subr.mxu0 0.0
    %144 = vmatpush1.msra.mxu0 %v110
    %145 = vmatprep.subr.mxu0 0.0
    %146 = vmatpush1.msra.mxu0 %v111
    %147 = vmatprep.subr.mxu0 0.0
    %148 = vmatpush1.msra.mxu0 %v112
    %149 = vmatprep.subr.mxu0 0.0
    %150 = vmatpush1.msra.mxu0 %v113
    %151 = vmatprep.subr.mxu0 0.0
    %152 = vmatpush1.msra.mxu0 0.0
    %153 = vmatprep.subr.mxu0 0.0
    %154 = vmatpush1.msra.mxu0 0.0
    %155 = vmatprep.subr.mxu0 0.0
    %156 = vmatpush1.msra.mxu0 0.0
    %157 = vmatprep.subr.mxu0 0.0
    %158 = vmatpush1.msra.mxu0 0.0
    %159 = vmatprep.subr.mxu0 0.0
    %160 = vmatpush1.msra.mxu0 0.0
    %161 = vmatprep.subr.mxu0 0.0
    %162 = vmatpush1.msra.mxu0 0.0
    %163 = vmatprep.subr.mxu0 0.0
    %164 = vmatpush1.msra.mxu0 0.0
    %165 = vmatprep.subr.mxu0 0.0
    %166 = vmatpush1.msra.mxu0 0.0
    %167 = vmatprep.subr.mxu0 0.0
    %168 = vmatpush1.msra.mxu0 0.0
    %169 = vmatprep.subr.mxu0 0.0
    %170 = vmatpush1.msra.mxu0 0.0
    %171 = vmatprep.subr.mxu0 0.0
    %172 = vmatpush1.msra.mxu0 0.0
    %173 = vmatprep.subr.mxu0 0.0
    %174 = vmatpush1.msra.mxu0 0.0
    %175 = vmatprep.subr.mxu0 0.0
    %176 = vmatpush1.msra.mxu0 0.0
    %177 = vmatprep.subr.mxu0 0.0
    %178 = vmatpush1.msra.mxu0 0.0
    %179 = vmatprep.subr.mxu0 0.0
    %180 = vmatpush1.msra.mxu0 0.0
    %181 = vmatprep.subr.mxu0 0.0
    %182 = vmatpush1.msra.mxu0 0.0
    %183 = vmatprep.subr.mxu0 0.0
    %184 = vmatpush1.msra.mxu0 0.0
    %185 = vmatprep.subr.mxu0 0.0
    %186 = vmatpush1.msra.mxu0 0.0
    %187 = vmatprep.mubr.f32.mxu0 0.0
    %188 = vmatmul.mubr.f32.gmra.mrb[0].mxu0 %v121
    %v189 = vpop.f32.mrb[0].mxu0
    %v190 = vadd.f32 %v118, %v189
    %v191 = vpop.f32.mrb[0].mxu0
    %192 = vdwg.mxu0
    %v193 = vxor.u32 %v190, 2147483648
    %v194 = vmul.f32 %v193, 1.442695
    %v195 = vpow.pop %v194
    %v196 = vadd.f32 %v195, 1.0
    %v197 = vrcp.pop %v196
    %v198 = vmul.f32 1.0, %v197
    %v199 = vtanh.pop %v190
    %v200 = vmul.f32 %v198, %v64
    %202 = vrot.lane.b32.xlu0 %v199, 64
    %v203 = vpop.permute.xlu0 %202
    %v205 = vmul.f32 %v198, %v203
    %207 = vrot.lane.b32.xlu0 %v205, 32
    %v208 = vpop.permute.xlu0 %207
    %v210 = vadd.f32 %v200, %v208
    %v211 = vtanh.pop %v210
    %213 = vrot.lane.b32.xlu0 %v211, 64
    %v214 = vpop.permute.xlu0 %213
    %v216 = vmul.f32 %v198, %v214
    %218 = vrot.lane.b32.xlu0 %v216, 32
    %v219 = vpop.permute.xlu0 %218
    %v221 = vsel %vm65, %v219, %v210
    %vm222 = vcmask 517120
    %223 = vst.msk [vmem:[#allocation9] sm:$0x3] %vm222, %v221
    %v224 = vld [vmem:[#allocation7 + $0x78] sm:$0xff]
    %v225 = vld [vmem:[#allocation7 + $0x80] sm:$0xff]
    %v226 = vld [vmem:[#allocation7 + $0x88] sm:$0xff]
    %v227 = vld [vmem:[#allocation7 + $0x90] sm:$0xff]
    %v229 = vsel %vm65, %v60, 0
    %v232 = vsel %vm65, %v61, 0
    %v235 = vsel %vm65, %v62, 0
    %v238 = vsel %vm65, %v63, 0
    %240 = vmatprep.subr.mxu0 0.0
    %241 = vmatpush1.msra.mxu0 %v224
    %242 = vmatprep.subr.mxu0 0.0
    %243 = vmatpush1.msra.mxu0 %v225
    %244 = vmatprep.subr.mxu0 0.0
    %245 = vmatpush1.msra.mxu0 %v226
    %246 = vmatprep.subr.mxu0 0.0
    %247 = vmatpush1.msra.mxu0 %v227
    %248 = vmatprep.subr.mxu0 0.0
    %249 = vmatpush1.msra.mxu0 0.0
    %250 = vmatprep.subr.mxu0 0.0
    %251 = vmatpush1.msra.mxu0 0.0
    %252 = vmatprep.subr.mxu0 0.0
    %253 = vmatpush1.msra.mxu0 0.0
    %254 = vmatprep.subr.mxu0 0.0
    %255 = vmatpush1.msra.mxu0 0.0
    %256 = vmatprep.subr.mxu0 0.0
    %257 = vmatpush1.msra.mxu0 0.0
    %258 = vmatprep.subr.mxu0 0.0
    %259 = vmatpush1.msra.mxu0 0.0
    %260 = vmatprep.subr.mxu0 0.0
    %261 = vmatpush1.msra.mxu0 0.0
    %262 = vmatprep.subr.mxu0 0.0
    %263 = vmatpush1.msra.mxu0 0.0
    %264 = vmatprep.subr.mxu0 0.0
    %265 = vmatpush1.msra.mxu0 0.0
    %266 = vmatprep.subr.mxu0 0.0
    %267 = vmatpush1.msra.mxu0 0.0
    %268 = vmatprep.subr.mxu0 0.0
    %269 = vmatpush1.msra.mxu0 0.0
    %270 = vmatprep.subr.mxu0 0.0
    %271 = vmatpush1.msra.mxu0 0.0
    %272 = vmatprep.subr.mxu0 0.0
    %273 = vmatpush1.msra.mxu0 0.0
    %274 = vmatprep.subr.mxu0 0.0
    %275 = vmatpush1.msra.mxu0 0.0
    %276 = vmatprep.subr.mxu0 0.0
    %277 = vmatpush1.msra.mxu0 0.0
    %278 = vmatprep.subr.mxu0 0.0
    %279 = vmatpush1.msra.mxu0 0.0
    %280 = vmatprep.subr.mxu0 0.0
    %281 = vmatpush1.msra.mxu0 0.0
    %282 = vmatprep.subr.mxu0 0.0
    %283 = vmatpush1.msra.mxu0 0.0
    %284 = vmatprep.subr.mxu0 0.0
    %285 = vmatpush1.msra.mxu0 0.0
    %286 = vmatprep.subr.mxu0 0.0
    %287 = vmatpush1.msra.mxu0 0.0
    %288 = vmatprep.subr.mxu0 0.0
    %289 = vmatpush1.msra.mxu0 0.0
    %290 = vmatprep.subr.mxu0 0.0
    %291 = vmatpush1.msra.mxu0 0.0
    %292 = vmatprep.subr.mxu0 0.0
    %293 = vmatpush1.msra.mxu0 0.0
    %294 = vmatprep.subr.mxu0 0.0
    %295 = vmatpush1.msra.mxu0 0.0
    %296 = vmatprep.subr.mxu0 0.0
    %297 = vmatpush1.msra.mxu0 0.0
    %298 = vmatprep.subr.mxu0 0.0
    %299 = vmatpush1.msra.mxu0 0.0
    %300 = vmatprep.subr.mxu0 0.0
    %301 = vmatpush1.msra.mxu0 0.0
    %302 = vmatprep.subr.mxu0 0.0
    %303 = vmatpush1.msra.mxu0 0.0
    %304 = vmatprep.mubr.f32.mxu0 0.0
    %305 = vmatmul.mubr.f32.gmra.mrb[0].mxu0 %v229
    %v306 = vpop.f32.mrb[0].mxu0
    %v307 = vadd.f32 0.0, %v306
    %v308 = vpop.f32.mrb[0].mxu0
    %309 = vmatprep.mubr.f32.mxu0 0.0
    %310 = vmatmul.mubr.f32.gmra.mrb[0].mxu0 %v232
    %v311 = vpop.f32.mrb[0].mxu0
    %v312 = vadd.f32 0.0, %v311
    %v313 = vpop.f32.mrb[0].mxu0
    %314 = vmatprep.mubr.f32.mxu0 0.0
    %315 = vmatmul.mubr.f32.gmra.mrb[0].mxu0 %v235
    %v316 = vpop.f32.mrb[0].mxu0
    %v317 = vadd.f32 0.0, %v316
    %v318 = vpop.f32.mrb[0].mxu0
    %319 = vmatprep.mubr.f32.mxu0 0.0
    %320 = vmatmul.mubr.f32.gmra.mrb[0].mxu0 %v238
    %v321 = vpop.f32.mrb[0].mxu0
    %v322 = vadd.f32 0.0, %v321
    %v323 = vpop.f32.mrb[0].mxu0
    %324 = vdwg.mxu0
    %v325 = vld [vmem:[#allocation7 + $0x98] sm:$0xff]
    %v326 = vld [vmem:[#allocation7 + $0xa0] sm:$0xff]
    %v327 = vld [vmem:[#allocation7 + $0xa8] sm:$0xff]
    %v328 = vld [vmem:[#allocation7 + $0xb0] sm:$0xff]
    %v329 = vld [vmem:[#allocation7 + $0xb8] sm:$0x1]
    %v330 = vlaneseq
    %v331 = vshrl.u32 %v330, 7
    %v332 = vsub.s32 0, %v331
    %v333 = vrot.slane %v329, %v332
    %v334 = vsel %vm65, %v219, 0
    %336 = vmatprep.subr.mxu0 0.0
    %337 = vmatpush1.msra.mxu0 %v325
    %338 = vmatprep.subr.mxu0 0.0
    %339 = vmatpush1.msra.mxu0 %v326
    %340 = vmatprep.subr.mxu0 0.0
    %341 = vmatpush1.msra.mxu0 %v327
    %342 = vmatprep.subr.mxu0 0.0
    %343 = vmatpush1.msra.mxu0 %v328
    %344 = vmatprep.subr.mxu0 0.0
    %345 = vmatpush1.msra.mxu0 0.0
    %346 = vmatprep.subr.mxu0 0.0
    %347 = vmatpush1.msra.mxu0 0.0
    %348 = vmatprep.subr.mxu0 0.0
    %349 = vmatpush1.msra.mxu0 0.0
    %350 = vmatprep.subr.mxu0 0.0
    %351 = vmatpush1.msra.mxu0 0.0
    %352 = vmatprep.subr.mxu0 0.0
    %353 = vmatpush1.msra.mxu0 0.0
    %354 = vmatprep.subr.mxu0 0.0
    %355 = vmatpush1.msra.mxu0 0.0
    %356 = vmatprep.subr.mxu0 0.0
    %357 = vmatpush1.msra.mxu0 0.0
    %358 = vmatprep.subr.mxu0 0.0
    %359 = vmatpush1.msra.mxu0 0.0
    %360 = vmatprep.subr.mxu0 0.0
    %361 = vmatpush1.msra.mxu0 0.0
    %362 = vmatprep.subr.mxu0 0.0
    %363 = vmatpush1.msra.mxu0 0.0
    %364 = vmatprep.subr.mxu0 0.0
    %365 = vmatpush1.msra.mxu0 0.0
    %366 = vmatprep.subr.mxu0 0.0
    %367 = vmatpush1.msra.mxu0 0.0
    %368 = vmatprep.subr.mxu0 0.0
    %369 = vmatpush1.msra.mxu0 0.0
    %370 = vmatprep.subr.mxu0 0.0
    %371 = vmatpush1.msra.mxu0 0.0
    %372 = vmatprep.subr.mxu0 0.0
    %373 = vmatpush1.msra.mxu0 0.0
    %374 = vmatprep.subr.mxu0 0.0
    %375 = vmatpush1.msra.mxu0 0.0
    %376 = vmatprep.subr.mxu0 0.0
    %377 = vmatpush1.msra.mxu0 0.0
    %378 = vmatprep.subr.mxu0 0.0
    %379 = vmatpush1.msra.mxu0 0.0
    %380 = vmatprep.subr.mxu0 0.0
    %381 = vmatpush1.msra.mxu0 0.0
    %382 = vmatprep.subr.mxu0 0.0
    %383 = vmatpush1.msra.mxu0 0.0
    %384 = vmatprep.subr.mxu0 0.0
    %385 = vmatpush1.msra.mxu0 0.0
    %386 = vmatprep.subr.mxu0 0.0
    %387 = vmatpush1.msra.mxu0 0.0
    %388 = vmatprep.subr.mxu0 0.0
    %389 = vmatpush1.msra.mxu0 0.0
    %390 = vmatprep.subr.mxu0 0.0
    %391 = vmatpush1.msra.mxu0 0.0
    %392 = vmatprep.subr.mxu0 0.0
    %393 = vmatpush1.msra.mxu0 0.0
    %394 = vmatprep.subr.mxu0 0.0
    %395 = vmatpush1.msra.mxu0 0.0
    %396 = vmatprep.subr.mxu0 0.0
    %397 = vmatpush1.msra.mxu0 0.0
    %398 = vmatprep.subr.mxu0 0.0
    %399 = vmatpush1.msra.mxu0 0.0
    %400 = vmatprep.mubr.f32.mxu0 0.0
    %401 = vmatmul.mubr.f32.gmra.mrb[0].mxu0 %v334
    %v402 = vpop.f32.mrb[0].mxu0
    %v403 = vadd.f32 %v333, %v402
    %v404 = vpop.f32.mrb[0].mxu0
    %405 = vdwg.mxu0
    %v408 = vunpack.c.l.s4 1966171168
    %v409 = vunpack.c.0.s8 %v408
    %v410 = vlaneseq
    %v411 = vshrl.u32 %v410, 7
    %v412 = vsub.s32 %v409, %v411
    %v413 = vrot.slane %v403, %v412
    %v414 = vcombine.high %v413, %v413
    %v416 = vunpack.c.l.s4 1966171168
    %v417 = vunpack.c.0.s8 %v416
    %v418 = vlaneseq
    %v419 = vshrl.u32 %v418, 7
    %v420 = vsub.s32 %v417, %v419
    %v421 = vrot.slane %v413, %v420
    %v423 = vunpack.c.l.s4 1966171168
    %v424 = vunpack.c.0.s8 %v423
    %v425 = vlaneseq
    %v426 = vshrl.u32 %v425, 7
    %v427 = vsub.s32 %v424, %v426
    %v428 = vrot.slane %v414, %v427
    %v429 = vlaneseq
    %v430 = vshrl.u32 %v429, 7
    %v431 = vsub.s32 0, %v430
    %v432 = vrot.slane %v421, %v431
    %v433 = vlaneseq
    %v434 = vshrl.u32 %v433, 7
    %v435 = vsub.s32 0, %v434
    %v436 = vrot.slane %v428, %v435
    %v439 = vadd.f32 %v307, %v432
    %v440 = vadd.f32 %v312, %v432
    %v441 = vadd.f32 %v317, %v436
    %v442 = vadd.f32 %v322, %v436
    %v443 = vmax.f32 %v439, 0.0
    %v444 = vmax.f32 %v440, 0.0
    %v445 = vmax.f32 %v441, 0.0
    %v446 = vmax.f32 %v442, 0.0
    %vm447 = vcmask 523264
    %448 = vst.msk [vmem:[#allocation8] sm:$0xff] %vm447, %v443
    %449 = vst.msk [vmem:[#allocation8 + $0x8] sm:$0xff] %vm447, %v444
    %450 = vst.msk [vmem:[#allocation8 + $0x10] sm:$0xff] %vm447, %v445
    %451 = vst.msk [vmem:[#allocation8 + $0x18] sm:$0xff] %vm447, %v446
    // Predicated region
    $region30: #{tpu_custom_call.1} parent=1 // pred_check
      _
    $region31: #{tpu_custom_call.1} parent=1 // pred_check_branch
      %453 = sbr.rel (0) target = $region33
    $region32: #{tpu_custom_call.1} parent=1 // pred_region
      %s455 = ssub.s32 512, 512
      %456 = vsyncadd [#allocation4], %s455
      %s457 = sshll.u32 [#allocation8], 4
      %s458 = int_to_ptr.vmem [resolvable:$true] %s457
      %463 = dma.vmem_to_hbm [thread:$0]  %s458, 512, %s4, [#allocation4], 128, 128, 8
    $region33: #{tpu_custom_call.1} parent=1 // pred_fallthru
      _
    // Predicated region
    $region34: #{tpu_custom_call.1} parent=1 // pred_check
      _
    $region35: #{tpu_custom_call.1} parent=1 // pred_check_branch
      %465 = sbr.rel (0) target = $region37
    $region36: #{tpu_custom_call.1} parent=1 // pred_region
      %s467 = ssub.s32 32, 32
      %468 = vsyncadd [#allocation10], %s467
      %s470 = sshll.u32 [#allocation9], 4
      %s471 = int_to_ptr.vmem [resolvable:$true] %s470
      %473 = dma.vmem_to_hbm [thread:$0]  %s471, 32, %s5, [#allocation10]
    $region37: #{tpu_custom_call.1} parent=1 // pred_fallthru
      _
    // Predicated region
    $region38: #{tpu_custom_call.1} parent=1 // pred_check
      _
    $region39: #{tpu_custom_call.1} parent=1 // pred_check_branch
      %475 = sbr.rel (0) target = $region41
    $region40: #{tpu_custom_call.1} parent=1 // pred_region
      %476 = dma.done [#allocation4], 512
    $region41: #{tpu_custom_call.1} parent=1 // pred_fallthru
      _
    // Predicated region
    $region42: #{tpu_custom_call.1} parent=1 // pred_check
      _
    $region43: #{tpu_custom_call.1} parent=1 // pred_check_branch
      %478 = sbr.rel (0) target = $region45
    $region44: #{tpu_custom_call.1} parent=1 // pred_region
      %479 = dma.done [#allocation10], 32
    $region45: #{tpu_custom_call.1} parent=1 // pred_fallthru
      _
    %480 = vsyncpa [#allocation3], 1
    %481 = vsyncpa [#allocation6], 1
    %482 = vsyncpa [#allocation4], 1
    %483 = vsyncpa [#allocation10], 1

</llo_original>
